<compile_context>
chip_gen: v5e
topology: v5e:2x2
jax: 0.10.0
libtpu: 0.0.40
codegen_flags: <defaults>
</compile_context>

<pallas_src>
import jax
import jax.numpy as jnp
from jax.experimental import pallas as pl
from jax.experimental.pallas import tpu as pltpu

LANE = 128      # lane width of a vreg
SUBLANE = 16    # bf16 sublane packing: one vreg holds [16, 128]


def _round_up(n, m):
    return ((n + m - 1) // m) * m


def discrete_actor_kernel(x_ref, w1_ref, b1_ref, w2_ref, b2_ref, wl_ref, bl_ref,
                          out_ref):
    # One batch tile per grid step; all weights/biases are VMEM-resident
    # (constant index_map).  x arrives as f32 and is cast to bf16 here so the
    # wrapper does not need an extra pad/cast pass over x in HBM.
    x = x_ref[...].astype(jnp.bfloat16)                              # (TB, in)

    # layer1: Linear + ReLU  (bf16 MXU, f32 accumulate; bias/ReLU in f32 on VPU)
    h1 = jnp.dot(x, w1_ref[...], preferred_element_type=jnp.float32) + b1_ref[...]
    h1 = jnp.maximum(h1, 0.0).astype(jnp.bfloat16)

    # layer2: Linear + ReLU
    h2 = jnp.dot(h1, w2_ref[...], preferred_element_type=jnp.float32) + b2_ref[...]
    h2 = jnp.maximum(h2, 0.0).astype(jnp.bfloat16)

    # logits head (columns zero-padded to a lane-dense 128-wide slab),
    # stored as bf16 to halve the dominant HBM write stream.
    logits = jnp.dot(h2, wl_ref[...], preferred_element_type=jnp.float32) + bl_ref[...]
    out_ref[...] = logits.astype(out_ref.dtype)


def discrete_actor_forward(x, params, *, tile_b=4096):
    """x: (batch, input_dim) float32. params: dict of f32 weights/biases.

    Returns logits of shape (batch, output_dim), float32.
    """
    batch, in_dim = x.shape
    hid1 = params["w1"].shape[1]
    hid2 = params["w2"].shape[1]
    out_dim = params["wl"].shape[1]
    out_pad = _round_up(out_dim, LANE)

    # Batch tile: large (amortize ~0.35us/step); keep a multiple of 16 so both
    # the f32 input (8-sublane) and bf16 output (16-sublane) tilings are happy.
    tb = min(tile_b, _round_up(max(batch, SUBLANE), SUBLANE))
    grid = (pl.cdiv(batch, tb),)   # no explicit batch padding: Pallas masks
                                   # the partial final output block.

    # Tiny one-time casts (weights are a few KB; not a per-row HBM stream).
    w1 = params["w1"].astype(jnp.bfloat16)
    w2 = params["w2"].astype(jnp.bfloat16)
    wl = jnp.zeros((hid2, out_pad), jnp.bfloat16).at[:, :out_dim].set(
        params["wl"].astype(jnp.bfloat16))
    b1 = params["b1"].astype(jnp.float32)
    b2 = params["b2"].astype(jnp.float32)
    bl = jnp.zeros((1, out_pad), jnp.float32).at[:, :out_dim].set(
        params["bl"].astype(jnp.float32))

    # Weights/biases: full block, constant index_map -> VMEM-resident across grid.
    const = lambda arr: pl.BlockSpec(arr.shape, lambda i: (0,) * arr.ndim)

    flops = 2 * batch * (in_dim * hid1 + hid1 * hid2 + hid2 * out_pad)
    bytes_accessed = (
        batch * in_dim * 4                                   # f32 x read
        + (w1.size + w2.size + wl.size) * 2                  # bf16 weights
        + (b1.size + b2.size + bl.size) * 4                  # f32 biases
        + batch * out_pad * 2)                               # bf16 logits write

    out = pl.pallas_call(
        discrete_actor_kernel,
        out_shape=jax.ShapeDtypeStruct((batch, out_pad), jnp.bfloat16),
        grid_spec=pl.GridSpec(
            grid=grid,
            in_specs=[
                pl.BlockSpec((tb, in_dim), lambda i: (i, 0)),   # x: tiled over batch
                const(w1), const(b1),
                const(w2), const(b2),
                const(wl), const(bl),
            ],
            out_specs=pl.BlockSpec((tb, out_pad), lambda i: (i, 0)),
        ),
        compiler_params=pltpu.CompilerParams(
            dimension_semantics=("parallel",)),
        cost_estimate=pl.CostEstimate(
            flops=flops, transcendentals=0, bytes_accessed=bytes_accessed),
    )(x, w1, b1, w2, b2, wl, bl)

    # Fused slice + f32 cast back to the module's (batch, out_dim) contract.
    # Perf-sensitive consumers can use the padded bf16 slab `out` directly.
    return out[:batch, :out_dim].astype(jnp.float32)


def init_actor_params(key, input_dim, output_dim):
    """Deterministic synthetic init (uniform, torch default scale)."""
    ks = jax.random.split(key, 6)

    def lin(kw, kb, fan_in, fan_out):
        bound = 1.0 / jnp.sqrt(fan_in)
        w = jax.random.uniform(kw, (fan_in, fan_out), jnp.float32, -bound, bound)
        b = jax.random.uniform(kb, (1, fan_out), jnp.float32, -bound, bound)
        return w, b

    w1, b1 = lin(ks[0], ks[1], input_dim, 64)
    w2, b2 = lin(ks[2], ks[3], 64, 32)
    wl, bl = lin(ks[4], ks[5], 32, output_dim)
    return dict(w1=w1, b1=b1, w2=w2, b2=b2, wl=wl, bl=bl)


def _reference_logits(x, params):
    # Same numerics as the kernel: bf16 operands, f32 accumulation, f32 bias/ReLU.
    # (The kernel additionally rounds the final logits to bf16 on store.)
    h1 = jnp.maximum(
        jnp.dot(x.astype(jnp.bfloat16), params["w1"].astype(jnp.bfloat16),
                preferred_element_type=jnp.float32) + params["b1"], 0.0)
    h2 = jnp.maximum(
        jnp.dot(h1.astype(jnp.bfloat16), params["w2"].astype(jnp.bfloat16),
                preferred_element_type=jnp.float32) + params["b2"], 0.0)
    return jnp.dot(h2.astype(jnp.bfloat16), params["wl"].astype(jnp.bfloat16),
                   preferred_element_type=jnp.float32) + params["bl"]


if __name__ == "__main__":
    key = jax.random.PRNGKey(0)
    k_x, k_p, k_x2 = jax.random.split(key, 3)

    # Small shapes consistent with the module (batch x observations -> logits).
    batch, input_dim, output_dim = 2, 8, 4
    x = jax.random.normal(k_x, (batch, input_dim), jnp.float32)
    params = init_actor_params(k_p, input_dim, output_dim)

    logits = discrete_actor_forward(x, params)
    jax.block_until_ready(logits)
    assert logits.shape == (batch, output_dim)
    # bf16-rounded store -> slightly looser tolerance than before.
    assert jnp.allclose(logits, _reference_logits(x, params),
                        atol=2e-2, rtol=2e-2), "logits mismatch (small batch)"

    # Larger, non-tile-multiple batch with a small tile override to exercise a
    # multi-step grid with a masked partial final block.
    big_batch = 1000
    xb = jax.random.normal(k_x2, (big_batch, input_dim), jnp.float32)
    logits_big = discrete_actor_forward(xb, params, tile_b=256)
    jax.block_until_ready(logits_big)
    assert logits_big.shape == (big_batch, output_dim)
    assert jnp.allclose(logits_big, _reference_logits(xb, params),
                        atol=2e-2, rtol=2e-2), "logits mismatch (large batch)"

    print("KERNEL_OK")
</pallas_src>

<mosaic_0001>
module attributes {stable_mosaic.version = 11 : i64} {
  func.func @discrete_actor_kernel(%arg0: i32, %arg1: memref<16x8xf32, #tpu.memory_space<vmem>>, %arg2: memref<8x64xbf16, #tpu.memory_space<vmem>>, %arg3: memref<1x64xf32, #tpu.memory_space<vmem>>, %arg4: memref<64x32xbf16, #tpu.memory_space<vmem>>, %arg5: memref<1x32xf32, #tpu.memory_space<vmem>>, %arg6: memref<32x128xbf16, #tpu.memory_space<vmem>>, %arg7: memref<1x128xf32, #tpu.memory_space<vmem>>, %arg8: memref<16x128xbf16, #tpu.memory_space<vmem>>) attributes {dimension_semantics = [#tpu.dimension_semantics<parallel>], iteration_bounds = array<i64: 1>, scalar_prefetch = 0 : i64, scratch_operands = 0 : i64, tpu.core_type = #tpu.core_type<tc>, window_params = [{transform_indices = @transform_0, window_bounds = array<i64: 16, 8>}, {pipeline_mode = #tpu.pipeline_mode<synchronous>, transform_indices = @transform_1, window_bounds = array<i64: 8, 64>}, {pipeline_mode = #tpu.pipeline_mode<synchronous>, transform_indices = @transform_2, window_bounds = array<i64: 1, 64>}, {pipeline_mode = #tpu.pipeline_mode<synchronous>, transform_indices = @transform_3, window_bounds = array<i64: 64, 32>}, {pipeline_mode = #tpu.pipeline_mode<synchronous>, transform_indices = @transform_4, window_bounds = array<i64: 1, 32>}, {pipeline_mode = #tpu.pipeline_mode<synchronous>, transform_indices = @transform_5, window_bounds = array<i64: 32, 128>}, {pipeline_mode = #tpu.pipeline_mode<synchronous>, transform_indices = @transform_6, window_bounds = array<i64: 1, 128>}, {transform_indices = @transform_7, window_bounds = array<i64: 16, 128>}]} {
    %c0 = arith.constant 0 : index
    %c0_0 = arith.constant 0 : index
    %0 = vector.load %arg1[%c0, %c0_0] : memref<16x8xf32, #tpu.memory_space<vmem>>, vector<16x8xf32>
    %1 = arith.truncf %0 : vector<16x8xf32> to vector<16x8xbf16>
    %c0_1 = arith.constant 0 : index
    %c0_2 = arith.constant 0 : index
    %2 = vector.load %arg2[%c0_1, %c0_2] : memref<8x64xbf16, #tpu.memory_space<vmem>>, vector<8x64xbf16>
    %cst = arith.constant dense<0.000000e+00> : vector<16x64xf32>
    %3 = tpu.matmul %1, %2, %cst {dimension_numbers = #tpu.dot_dimension_numbers<[1], [0], [0], [1], [0, 0, 1, 1], [], []>} : vector<16x8xbf16>, vector<8x64xbf16>, vector<16x64xf32> -> vector<16x64xf32>
    %c0_3 = arith.constant 0 : index
    %c0_4 = arith.constant 0 : index
    %4 = vector.load %arg3[%c0_3, %c0_4] : memref<1x64xf32, #tpu.memory_space<vmem>>, vector<1x64xf32>
    %5 = vector.broadcast %4 : vector<1x64xf32> to vector<16x64xf32>
    %6 = arith.addf %3, %5 : vector<16x64xf32>
    %cst_5 = arith.constant 0.000000e+00 : f32
    %7 = vector.broadcast %cst_5 : f32 to vector<16x64xf32>
    %8 = arith.maximumf %6, %7 : vector<16x64xf32>
    %9 = arith.truncf %8 : vector<16x64xf32> to vector<16x64xbf16>
    %c0_6 = arith.constant 0 : index
    %c0_7 = arith.constant 0 : index
    %10 = vector.load %arg4[%c0_6, %c0_7] : memref<64x32xbf16, #tpu.memory_space<vmem>>, vector<64x32xbf16>
    %cst_8 = arith.constant dense<0.000000e+00> : vector<16x32xf32>
    %11 = tpu.matmul %9, %10, %cst_8 {dimension_numbers = #tpu.dot_dimension_numbers<[1], [0], [0], [1], [0, 0, 1, 1], [], []>} : vector<16x64xbf16>, vector<64x32xbf16>, vector<16x32xf32> -> vector<16x32xf32>
    %c0_9 = arith.constant 0 : index
    %c0_10 = arith.constant 0 : index
    %12 = vector.load %arg5[%c0_9, %c0_10] : memref<1x32xf32, #tpu.memory_space<vmem>>, vector<1x32xf32>
    %13 = vector.broadcast %12 : vector<1x32xf32> to vector<16x32xf32>
    %14 = arith.addf %11, %13 : vector<16x32xf32>
    %cst_11 = arith.constant 0.000000e+00 : f32
    %15 = vector.broadcast %cst_11 : f32 to vector<16x32xf32>
    %16 = arith.maximumf %14, %15 : vector<16x32xf32>
    %17 = arith.truncf %16 : vector<16x32xf32> to vector<16x32xbf16>
    %c0_12 = arith.constant 0 : index
    %c0_13 = arith.constant 0 : index
    %18 = vector.load %arg6[%c0_12, %c0_13] : memref<32x128xbf16, #tpu.memory_space<vmem>>, vector<32x128xbf16>
    %cst_14 = arith.constant dense<0.000000e+00> : vector<16x128xf32>
    %19 = tpu.matmul %17, %18, %cst_14 {dimension_numbers = #tpu.dot_dimension_numbers<[1], [0], [0], [1], [0, 0, 1, 1], [], []>} : vector<16x32xbf16>, vector<32x128xbf16>, vector<16x128xf32> -> vector<16x128xf32>
    %c0_15 = arith.constant 0 : index
    %c0_16 = arith.constant 0 : index
    %20 = vector.load %arg7[%c0_15, %c0_16] : memref<1x128xf32, #tpu.memory_space<vmem>>, vector<1x128xf32>
    %21 = vector.broadcast %20 : vector<1x128xf32> to vector<16x128xf32>
    %22 = arith.addf %19, %21 : vector<16x128xf32>
    %23 = arith.truncf %22 : vector<16x128xf32> to vector<16x128xbf16>
    %c0_17 = arith.constant 0 : index
    %c0_18 = arith.constant 0 : index
    %24 = vector.load %arg8[%c0_17, %c0_18] : memref<16x128xbf16, #tpu.memory_space<vmem>>, vector<16x128xbf16>
    tpu.vector_store %arg8[%c0_17, %c0_18], %23 {strides = array<i32>} : memref<16x128xbf16, #tpu.memory_space<vmem>>, vector<16x128xbf16>,
    return
  }
  func.func @transform_0(%arg0: i32) -> (i32, i32) {
    %c0_i32 = arith.constant 0 : i32
    %c0_i32_0 = arith.constant 0 : i32
    return %arg0, %c0_i32 : i32, i32
  }
  func.func @transform_1(%arg0: i32) -> (i32, i32) {
    %c0_i32 = arith.constant 0 : i32
    %c0_i32_0 = arith.constant 0 : i32
    %c0_i32_1 = arith.constant 0 : i32
    return %c0_i32, %c0_i32_0 : i32, i32
  }
  func.func @transform_2(%arg0: i32) -> (i32, i32) {
    %c0_i32 = arith.constant 0 : i32
    %c0_i32_0 = arith.constant 0 : i32
    %c0_i32_1 = arith.constant 0 : i32
    return %c0_i32, %c0_i32_0 : i32, i32
  }
  func.func @transform_3(%arg0: i32) -> (i32, i32) {
    %c0_i32 = arith.constant 0 : i32
    %c0_i32_0 = arith.constant 0 : i32
    %c0_i32_1 = arith.constant 0 : i32
    return %c0_i32, %c0_i32_0 : i32, i32
  }
  func.func @transform_4(%arg0: i32) -> (i32, i32) {
    %c0_i32 = arith.constant 0 : i32
    %c0_i32_0 = arith.constant 0 : i32
    %c0_i32_1 = arith.constant 0 : i32
    return %c0_i32, %c0_i32_0 : i32, i32
  }
  func.func @transform_5(%arg0: i32) -> (i32, i32) {
    %c0_i32 = arith.constant 0 : i32
    %c0_i32_0 = arith.constant 0 : i32
    %c0_i32_1 = arith.constant 0 : i32
    return %c0_i32, %c0_i32_0 : i32, i32
  }
  func.func @transform_6(%arg0: i32) -> (i32, i32) {
    %c0_i32 = arith.constant 0 : i32
    %c0_i32_0 = arith.constant 0 : i32
    %c0_i32_1 = arith.constant 0 : i32
    return %c0_i32, %c0_i32_0 : i32, i32
  }
  func.func @transform_7(%arg0: i32) -> (i32, i32) {
    %c0_i32 = arith.constant 0 : i32
    %c0_i32_0 = arith.constant 0 : i32
    return %arg0, %c0_i32 : i32, i32
  }
}

</mosaic_0001>

<llo_original>
// kernel: tpu_custom_call.1
$region0: #{tpu_custom_call.1}
  #allocation0 [shape = 'u32[]', space=smem, size = 0x4, offset = 0x4, fixed_abs, tag = 'smem constant byte address 0x4 - core index']
  #allocation1 [shape = 'u32[72,128]{1,0:T(1,128)}', space=vmem, size = 0x9000, scoped, tag = 'internal scratch']
  %s0 = inlined_call_operand.vmem [shape: f32[2,8], index: 0, kind: input, shape index: {}]
  %s1 = inlined_call_operand.vmem [shape: bf16[8,64], index: 1, kind: input, shape index: {}]
  %s2 = inlined_call_operand.vmem [shape: f32[1,64], index: 2, kind: input, shape index: {}]
  %s3 = inlined_call_operand.vmem [shape: bf16[64,32], index: 3, kind: input, shape index: {}]
  %s4 = inlined_call_operand.vmem [shape: f32[1,32], index: 4, kind: input, shape index: {}]
  %s5 = inlined_call_operand.vmem [shape: bf16[32,128], index: 5, kind: input, shape index: {}]
  %s6 = inlined_call_operand.vmem [shape: f32[1,128], index: 6, kind: input, shape index: {}]
  %s7 = inlined_call_operand.hbm [shape: bf16[2,128], index: 7, kind: output, shape index: {}]
  %s8 = sld [smem:[#allocation0]]
  $region38: #{tpu_custom_call.1} parent=0
    _
  %s10 = ssub.s32 1, %s8
  %s11 = scalar_select 0, %s10, %s8
  $region1: #{tpu_custom_call.1} parent=0
    #allocation2 [shape = 'u8[4096]{0}', space=vmem, size = 0x1000, scoped, tag = 'output window, operand 0, single buffered']
    #allocation3 [shape = 's32[1]{0}', space=sflag, size = 0x4, scoped, tag = 'scoped memory for tpu_custom_call.1']
    %12 = vsyncpa [#allocation3], 0
    // Predicated region
    $region2: #{tpu_custom_call.1} parent=1 // pred_check
      _
    $region3: #{tpu_custom_call.1} parent=1 // pred_check_branch
      %14 = sbr.rel (0) target = $region5
    $region4: #{tpu_custom_call.1} parent=1 // pred_region
      _
    $region5: #{tpu_custom_call.1} parent=1 // pred_fallthru
      _
    // Predicated region
    $region6: #{tpu_custom_call.1} parent=1 // pred_check
      _
    $region7: #{tpu_custom_call.1} parent=1 // pred_check_branch
      %16 = sbr.rel (0) target = $region9
    $region8: #{tpu_custom_call.1} parent=1 // pred_region
      _
    $region9: #{tpu_custom_call.1} parent=1 // pred_fallthru
      _
    // Predicated region
    $region10: #{tpu_custom_call.1} parent=1 // pred_check
      _
    $region11: #{tpu_custom_call.1} parent=1 // pred_check_branch
      %18 = sbr.rel (0) target = $region13
    $region12: #{tpu_custom_call.1} parent=1 // pred_region
      _
    $region13: #{tpu_custom_call.1} parent=1 // pred_fallthru
      _
    // Predicated region
    $region14: #{tpu_custom_call.1} parent=1 // pred_check
      _
    $region15: #{tpu_custom_call.1} parent=1 // pred_check_branch
      %20 = sbr.rel (0) target = $region17
    $region16: #{tpu_custom_call.1} parent=1 // pred_region
      _
    $region17: #{tpu_custom_call.1} parent=1 // pred_fallthru
      _
    // Predicated region
    $region18: #{tpu_custom_call.1} parent=1 // pred_check
      _
    $region19: #{tpu_custom_call.1} parent=1 // pred_check_branch
      %22 = sbr.rel (0) target = $region21
    $region20: #{tpu_custom_call.1} parent=1 // pred_region
      _
    $region21: #{tpu_custom_call.1} parent=1 // pred_fallthru
      _
    // Predicated region
    $region22: #{tpu_custom_call.1} parent=1 // pred_check
      _
    $region23: #{tpu_custom_call.1} parent=1 // pred_check_branch
      %24 = sbr.rel (0) target = $region25
    $region24: #{tpu_custom_call.1} parent=1 // pred_region
      _
    $region25: #{tpu_custom_call.1} parent=1 // pred_fallthru
      _
    // Predicated region
    $region26: #{tpu_custom_call.1} parent=1 // pred_check
      _
    $region27: #{tpu_custom_call.1} parent=1 // pred_check_branch
      %26 = sbr.rel (0) target = $region29
    $region28: #{tpu_custom_call.1} parent=1 // pred_region
      _
    $region29: #{tpu_custom_call.1} parent=1 // pred_fallthru
      _
    %v28 = vld [vmem:[%s0] sm:$0xff]
    %v29 = vld [vmem:[%s0 + $0x8] sm:$0xff]
    %v30 = vpack.c.bf16 %v29, %v28
    %v31 = vld [vmem:[%s1] sm:$0xf]
    %v32 = vld [vmem:[%s2] sm:$0x1]
    %v34 = vperm.slane %v32, 0
    %vm36 = vcmask 64512
    %v38 = vsel %vm36, %v30, 0
    %vm40 = vcmask 1043456
    %v42 = vsel %vm40, %v31, 0
    %44 = vmatpush.bf16.msra.mxu0 0
    %45 = vmatpush.bf16.msra.mxu0 0
    %46 = vmatpush.bf16.msra.mxu0 0
    %47 = vmatpush.bf16.msra.mxu0 0
    %48 = vmatpush.bf16.msra.mxu0 0
    %49 = vmatpush.bf16.msra.mxu0 0
    %50 = vmatpush.bf16.msra.mxu0 0
    %51 = vmatpush.bf16.msra.mxu0 %v42
    %52 = vmatmul.bf16.gmra.mxu0 %v38
    %v53 = vpop.f32.mrf.mxu0
    %v54 = vadd.f32 %v34, %v53
    %v55 = vpop.f32.mrf.mxu0
    %v56 = vadd.f32 %v34, %v55
    %57 = vdwg.mxu0
    %v58 = vmax.f32 %v54, 0.0
    %v59 = vmax.f32 %v56, 0.0
    %v60 = vpack.c.bf16 %v59, %v58
    %v61 = vld [vmem:[%s3] sm:$0xf]
    %v62 = vld [vmem:[%s3 + $0x4] sm:$0xf]
    %v63 = vld [vmem:[%s3 + $0x8] sm:$0xf]
    %v64 = vld [vmem:[%s3 + $0xc] sm:$0xf]
    %v65 = vld [vmem:[%s3 + $0x10] sm:$0xf]
    %v66 = vld [vmem:[%s3 + $0x14] sm:$0xf]
    %v67 = vld [vmem:[%s3 + $0x18] sm:$0xf]
    %v68 = vld [vmem:[%s3 + $0x1c] sm:$0xf]
    %v69 = vld [vmem:[%s4] sm:$0x1]
    %v71 = vperm.slane %v69, 0
    %v81 = vunpack.c.l.b16 %v61
    %v82 = vunpack.c.l.b16 %v62
    %v83 = vunpack.c.l.b16 %v63
    %v84 = vunpack.c.l.b16 %v64
    %v85 = vunpack.c.l.b16 %v65
    %v86 = vunpack.c.l.b16 %v66
    %v87 = vunpack.c.l.b16 %v67
    %v88 = vunpack.c.l.b16 %v68
    %v89 = vpack.c.b16 %v82, %v81
    %v90 = vpack.c.b16 %v84, %v83
    %v91 = vpack.c.b16 %v86, %v85
    %v92 = vpack.c.b16 %v88, %v87
    %vm97 = vcmask 523264
    %v99 = vsel %vm97, %v60, 0
    %101 = vmatpush.bf16.msra.mxu0 0
    %102 = vmatpush.bf16.msra.mxu0 0
    %103 = vmatpush.bf16.msra.mxu0 0
    %104 = vmatpush.bf16.msra.mxu0 0
    %105 = vmatpush.bf16.msra.mxu0 %v92
    %106 = vmatpush.bf16.msra.mxu0 %v91
    %107 = vmatpush.bf16.msra.mxu0 %v90
    %108 = vmatpush.bf16.msra.mxu0 %v89
    %109 = vmatmul.bf16.gmra.mxu0 %v99
    %v110 = vpop.f32.mrf.mxu0
    %v111 = vadd.f32 %v71, %v110
    %v112 = vpop.f32.mrf.mxu0
    %v113 = vadd.f32 %v71, %v112
    %114 = vdwg.mxu0
    %v115 = vmax.f32 %v111, 0.0
    %v116 = vmax.f32 %v113, 0.0
    %v117 = vpack.c.bf16 %v116, %v115
    %v118 = vld [vmem:[%s5] sm:$0xf]
    %v119 = vld [vmem:[%s5 + $0x4] sm:$0xf]
    %v120 = vld [vmem:[%s5 + $0x8] sm:$0xf]
    %v121 = vld [vmem:[%s5 + $0xc] sm:$0xf]
    %v122 = vld [vmem:[%s6] sm:$0x1]
    %v124 = vperm.slane %v122, 0
    %v130 = vunpack.c.l.b16 %v118
    %v131 = vunpack.c.l.b16 %v119
    %v132 = vunpack.c.l.b16 %v120
    %v133 = vunpack.c.l.b16 %v121
    %v134 = vpack.c.b16 %v131, %v130
    %v135 = vpack.c.b16 %v133, %v132
    %vm138 = vcmask 261120
    %v140 = vsel %vm138, %v117, 0
    %142 = vmatpush.bf16.msra.mxu0 0
    %143 = vmatpush.bf16.msra.mxu0 0
    %144 = vmatpush.bf16.msra.mxu0 0
    %145 = vmatpush.bf16.msra.mxu0 0
    %146 = vmatpush.bf16.msra.mxu0 0
    %147 = vmatpush.bf16.msra.mxu0 0
    %148 = vmatpush.bf16.msra.mxu0 %v135
    %149 = vmatpush.bf16.msra.mxu0 %v134
    %150 = vmatmul.bf16.gmra.mxu0 %v140
    %v151 = vpop.f32.mrf.mxu0
    %v152 = vadd.f32 %v124, %v151
    %v153 = vpop.f32.mrf.mxu0
    %v154 = vadd.f32 %v124, %v153
    %155 = vdwg.mxu0
    %v156 = vpack.c.bf16 %v152, %v152
    %v157 = vpack.c.bf16 %v154, %v154
    %v160 = vrot.slane %v156, 3
    %v161 = vrot.slane %v157, 3
    %vm162 = vcmask 1040384
    %v165 = vsel %vm162, %v156, %v160
    %vm166 = vcmask 1041409
    %v167 = vsel %vm166, %v156, %v160
    %v169 = vrot.slane %v167, 1
    %vm170 = vcmask 1042434
    %v171 = vsel %vm170, %v156, %v160
    %v173 = vrot.slane %v171, 2
    %vm174 = vcmask 1043459
    %v175 = vsel %vm174, %v156, %v160
    %v177 = vrot.slane %v175, 3
    %v180 = vsel %vm162, %v157, %v161
    %v181 = vsel %vm166, %v157, %v161
    %v183 = vrot.slane %v181, 1
    %v184 = vsel %vm170, %v157, %v161
    %v186 = vrot.slane %v184, 2
    %v187 = vsel %vm174, %v157, %v161
    %v189 = vrot.slane %v187, 3
    %198 = vst [vmem:[#allocation2] sm:$0x1] %v165
    %199 = vst [vmem:[#allocation2 + $0x1] sm:$0x1] %v169
    %200 = vst [vmem:[#allocation2 + $0x2] sm:$0x1] %v173
    %201 = vst [vmem:[#allocation2 + $0x3] sm:$0x1] %v177
    %202 = vst [vmem:[#allocation2 + $0x4] sm:$0x1] %v180
    %203 = vst [vmem:[#allocation2 + $0x5] sm:$0x1] %v183
    %204 = vst [vmem:[#allocation2 + $0x6] sm:$0x1] %v186
    %205 = vst [vmem:[#allocation2 + $0x7] sm:$0x1] %v189
    // Predicated region
    $region30: #{tpu_custom_call.1} parent=1 // pred_check
      _
    $region31: #{tpu_custom_call.1} parent=1 // pred_check_branch
      %207 = sbr.rel (0) target = $region33
    $region32: #{tpu_custom_call.1} parent=1 // pred_region
      %209 = vsyncadd [#allocation3], 112
      %s210 = sshll.u32 [#allocation2], 4
      %s211 = int_to_ptr.vmem [resolvable:$true] %s210
      %s212 = sshll.u32 %s7, 4
      %s213 = int_to_ptr.hbm [resolvable:$true] %s212
      %218 = dma.vmem_to_hbm [thread:$0]  %s211, 16, %s213, [#allocation3], 16, 16, 1
    $region33: #{tpu_custom_call.1} parent=1 // pred_fallthru
      _
    // Predicated region
    $region34: #{tpu_custom_call.1} parent=1 // pred_check
      _
    $region35: #{tpu_custom_call.1} parent=1 // pred_check_branch
      %220 = sbr.rel (0) target = $region37
    $region36: #{tpu_custom_call.1} parent=1 // pred_region
      %222 = dma.done [#allocation3], 128
    $region37: #{tpu_custom_call.1} parent=1 // pred_fallthru
      _
    %223 = vsyncpa [#allocation3], 1

</llo_original>
